<compile_context>
chip_gen: v6e
topology: v6e:2x2x1
jax: 0.10.0
libtpu: 0.0.40
codegen_flags: <defaults>
</compile_context>

<pallas_src>
import functools

import jax
import jax.numpy as jnp
from jax import lax
from jax.experimental import pallas as pl
from jax.experimental.pallas import tpu as pltpu


_LANE = 128


def _cdiv(a, b):
    return -(-a // b)


def _round_up(x, m):
    return _cdiv(x, m) * m


def _vmem_capacity_bytes():
    """Generation-aware VMEM capacity; conservative fallback (v7x = 64 MiB)."""
    try:
        info = pltpu.get_tpu_info()
        cap = getattr(info, "vmem_capacity_bytes", None)
        if cap:
            return int(cap)
    except Exception:
        pass
    return 64 * 1024 * 1024


# ----------------------------------------------------------------------------
# Kernel: partial Gram accumulation over M-tiles (grid = (parallel, reduce)).
# The f32 output block (one per parallel slice) is the accumulator.
# ----------------------------------------------------------------------------
def _gram_partial_kernel(*refs, has_mask, num_tiles, tiles_per_slice, tile_m,
                         m_valid, mask_last, cast_bf16):
    if has_mask:
        f_ref, mask_ref, out_ref = refs
    else:
        f_ref, out_ref = refs
        mask_ref = None

    p = pl.program_id(0)
    k = pl.program_id(1)
    t = p * tiles_per_slice + k          # global M-tile index

    @pl.when(k == 0)
    def _():
        out_ref[...] = jnp.zeros_like(out_ref)

    @pl.when(t < num_tiles)              # tail tiles of the parallel split are no-ops
    def _():
        f = f_ref[...]                   # stream in producer dtype
        if mask_ref is not None:
            # Fused mask multiply: free VALU filler under the DMA/MXU.
            f = f * mask_ref[...].astype(f.dtype)
        if mask_last:
            # Ragged last tile: lanes >= m_valid hold unspecified data; zero them.
            lane = lax.broadcasted_iota(jnp.int32, f.shape, 1)
            f = jnp.where(lane < (m_valid - t * tile_m), f, jnp.zeros_like(f))
        if cast_bf16:
            # Only enabled for f32 inputs with large N (MXU-bound regime).
            f = f.astype(jnp.bfloat16)
        # F @ F.T via a shared contraction dim; f32 accumulation on the MXU.
        out_ref[...] += lax.dot_general(
            f, f, dimension_numbers=(((1,), (1,)), ((), ())),
            preferred_element_type=jnp.float32)


def _gram_partials(f, mask=None, *, max_tile_m=None):
    """Returns unnormalized partial Grams of shape (P, N, N) in f32."""
    n, m = f.shape
    itemsize = f.dtype.itemsize
    mask_rows = 0 if mask is None else mask.shape[0]

    # --- tile size from a generation-aware VMEM budget ------------------------
    cap = _vmem_capacity_bytes()
    workset = max(cap // 2, 24 * 1024 * 1024)
    fixed = 2 * n * n * 4                              # double-buffered (N,N) f32 out block
    per_lane = 2 * (n + mask_rows) * itemsize          # double-buffered F (+mask) blocks
    tile_m = max((workset - fixed) // per_lane, _LANE)
    tile_m = max(_LANE, (tile_m // _LANE) * _LANE)
    tile_m = min(tile_m, _round_up(m, _LANE))
    if max_tile_m is not None:
        tile_m = min(tile_m, max(_LANE, (max_tile_m // _LANE) * _LANE))
    tile_m = int(tile_m)

    num_tiles = _cdiv(m, tile_m)
    num_parallel = 2 if num_tiles >= 2 else 1          # both TCs on v7x; cheap elsewhere
    tiles_per_slice = _cdiv(num_tiles, num_parallel)

    def f_index(pi, ki):
        # Clamp: tail iterations of the parallel split re-point at the last real
        # tile (never accumulated thanks to the in-kernel pl.when guard).
        return (0, jnp.minimum(pi * tiles_per_slice + ki, num_tiles - 1))

    in_specs = [pl.BlockSpec((n, tile_m), f_index)]
    args = [f]
    if mask is not None:
        in_specs.append(pl.BlockSpec((mask_rows, tile_m), f_index))
        args.append(mask)

    out_spec = pl.BlockSpec((None, n, n), lambda pi, ki: (pi, 0, 0))

    kernel = functools.partial(
        _gram_partial_kernel,
        has_mask=mask is not None,
        num_tiles=num_tiles,
        tiles_per_slice=tiles_per_slice,
        tile_m=tile_m,
        m_valid=m,
        mask_last=(m % tile_m) != 0,
        cast_bf16=(f.dtype == jnp.float32 and n >= 512),
    )

    need = per_lane * tile_m + fixed
    vmem_limit = int(min(max(need + 4 * 1024 * 1024, 32 * 1024 * 1024),
                         (cap * 3) // 4))

    mask_bytes = 0 if mask is None else int(mask.size) * mask.dtype.itemsize
    cost = pl.CostEstimate(
        flops=2 * n * n * m,
        transcendentals=0,
        bytes_accessed=n * m * itemsize + mask_bytes + num_parallel * n * n * 4,
    )

    return pl.pallas_call(
        kernel,
        out_shape=jax.ShapeDtypeStruct((num_parallel, n, n), jnp.float32),
        grid_spec=pltpu.PrefetchScalarGridSpec(
            num_scalar_prefetch=0,
            grid=(num_parallel, tiles_per_slice),
            in_specs=in_specs,
            out_specs=out_spec,
        ),
        compiler_params=pltpu.CompilerParams(
            dimension_semantics=("parallel", "arbitrary"),
            vmem_limit_bytes=vmem_limit,
        ),
        cost_estimate=cost,
    )(*args)


# ----------------------------------------------------------------------------
# Glue: NCHW -> (B*C, H*W) features plus a kernel-streamable mask.
# ----------------------------------------------------------------------------
def _features_and_mask(x, mask):
    b, c, h, w = x.shape
    f = x.reshape(b * c, h * w)          # contiguous reshape: no extra HBM traffic
    if mask is None:
        return f, None
    mask = jnp.asarray(mask).astype(x.dtype)
    if mask.size == h * w:
        # Pure spatial mask: one row, broadcast over all B*C sublanes in-kernel.
        return f, mask.reshape(1, h * w)
    # General (per-batch/per-channel) mask: expand to one row per feature map.
    return f, jnp.broadcast_to(mask, (b, c, h, w)).reshape(b * c, h * w)


def gram_matrix(x, mask=None, *, max_tile_m=None):
    b, c, h, w = x.shape
    f, m_rows = _features_and_mask(x, mask)
    partials = _gram_partials(f, m_rows, max_tile_m=max_tile_m)
    # Tiny epilogue on (P, N, N): sum the per-core partials and normalize.
    return jnp.sum(partials, axis=0) * (1.0 / float(b * c * h * w))


class StyleLoss:
    """JAX/Pallas equivalent of the PyTorch StyleLoss module (forward pass)."""

    def __init__(self, target_feature, mask=None):
        self.mask = mask
        self.target_gram_matrix = gram_matrix(target_feature, mask)  # detached by construction

    def __call__(self, x):
        b, c = x.shape[:2]
        g = gram_matrix(x, self.mask)
        diff = g - self.target_gram_matrix
        return jnp.sum(diff * diff) / (4.0 * (b * c) ** 2)


# ----------------------------------------------------------------------------
# Pure-JAX reference for correctness checks.
# ----------------------------------------------------------------------------
def _ref_gram(x, mask=None):
    b, c, h, w = x.shape
    if mask is not None:
        x = x * mask
    f = x.reshape(b * c, h * w).astype(jnp.float32)
    return (f @ f.T) / (b * c * h * w)


def _ref_style_loss(x, target_gram, mask=None):
    b, c = x.shape[:2]
    g = _ref_gram(x, mask)
    return jnp.sum((g - target_gram) ** 2) / (4.0 * (b * c) ** 2)


if __name__ == "__main__":
    key = jax.random.PRNGKey(0)
    k1, k2, k3, k4, k5, k6 = jax.random.split(key, 6)

    # Case 1: lane-aligned spatial size, no mask (single tile, P=1).
    B, C, H, W = 2, 4, 16, 16
    tgt = jax.random.normal(k1, (B, C, H, W), dtype=jnp.float32)
    x = jax.random.normal(k2, (B, C, H, W), dtype=jnp.float32)
    style = StyleLoss(tgt)
    loss = jax.block_until_ready(style(x))
    ref = _ref_style_loss(x, _ref_gram(tgt))
    assert jnp.allclose(loss, ref, rtol=1e-5, atol=1e-6), (loss, ref)

    # Case 2: ragged spatial size (H*W=100, in-kernel lane masking) + spatial mask.
    B2, C2, H2, W2 = 1, 8, 10, 10
    tgt2 = jax.random.normal(k3, (B2, C2, H2, W2), dtype=jnp.float32)
    x2 = jax.random.normal(k4, (B2, C2, H2, W2), dtype=jnp.float32)
    mask2 = (jax.random.uniform(k5, (B2, 1, H2, W2)) > 0.5).astype(jnp.float32)
    style2 = StyleLoss(tgt2, mask=mask2)
    loss2 = jax.block_until_ready(style2(x2))
    ref2 = _ref_style_loss(x2, _ref_gram(tgt2, mask2), mask2)
    assert jnp.allclose(loss2, ref2, rtol=1e-5, atol=1e-6), (loss2, ref2)

    # Case 3: multi-tile M with an even 2-way parallel split (T=4, P=2, K=2).
    B3, C3, H3, W3 = 1, 8, 32, 32
    x3 = jax.random.normal(k6, (B3, C3, H3, W3), dtype=jnp.float32)
    g_even = jax.block_until_ready(gram_matrix(x3, max_tile_m=256))
    assert jnp.allclose(g_even, _ref_gram(x3), rtol=1e-5, atol=1e-6)

    # Case 4: odd tile count + ragged last tile + fused mask (T=3, P=2, clamp+skip).
    mask3 = (x3[:, :1] > 0).astype(jnp.float32)          # (1, 1, 32, 32) spatial mask
    g_odd = jax.block_until_ready(gram_matrix(x3, mask3, max_tile_m=384))
    assert jnp.allclose(g_odd, _ref_gram(x3, mask3), rtol=1e-5, atol=1e-6)

    print("KERNEL_OK")
</pallas_src>

<mosaic_0001>
module attributes {stable_mosaic.version = 11 : i64} {
  func.func @_gram_partial_kernel(%arg0: i32, %arg1: i32, %arg2: memref<8x256xf32, #tpu.memory_space<vmem>>, %arg3: memref<1x8x8xf32, #tpu.memory_space<vmem>>) attributes {dimension_semantics = [#tpu.dimension_semantics<parallel>, #tpu.dimension_semantics<arbitrary>], iteration_bounds = array<i64: 1, 1>, scalar_prefetch = 0 : i64, scratch_operands = 0 : i64, tpu.core_type = #tpu.core_type<tc>, window_params = [{transform_indices = @transform_0, window_bounds = array<i64: 8, 256>}, {transform_indices = @transform_1, window_bounds = array<i64: 1, 8, 8>}]} {
    %c1_i32 = arith.constant 1 : i32
    %0 = arith.muli %arg0, %c1_i32 : i32
    %1 = arith.addi %0, %arg1 : i32
    %c0_i32 = arith.constant 0 : i32
    %2 = arith.cmpi eq, %arg1, %c0_i32 : i32
    %3 = arith.extui %2 : i1 to i32
    %c0_i32_0 = arith.constant 0 : i32
    %4 = arith.cmpi ne, %3, %c0_i32_0 : i32
    scf.if %4 {
      %cst = arith.constant 0.000000e+00 : f32
      %8 = vector.broadcast %cst : f32 to vector<8x8xf32>
      %c0 = arith.constant 0 : index
      %c0_3 = arith.constant 0 : index
      %c0_4 = arith.constant 0 : index
      %9 = vector.load %arg3[%c0, %c0_3, %c0_4] : memref<1x8x8xf32, #tpu.memory_space<vmem>>, vector<1x8x8xf32>
      %10 = vector.shape_cast %9 : vector<1x8x8xf32> to vector<8x8xf32>
      %11 = vector.shape_cast %8 : vector<8x8xf32> to vector<1x8x8xf32>
      tpu.vector_store %arg3[%c0, %c0_3, %c0_4], %11 {strides = array<i32>} : memref<1x8x8xf32, #tpu.memory_space<vmem>>, vector<1x8x8xf32>,
    } else {
    }
    %c1_i32_1 = arith.constant 1 : i32
    %5 = arith.cmpi slt, %1, %c1_i32_1 : i32
    %6 = arith.extui %5 : i1 to i32
    %c0_i32_2 = arith.constant 0 : i32
    %7 = arith.cmpi ne, %6, %c0_i32_2 : i32
    scf.if %7 {
      %c0 = arith.constant 0 : index
      %c0_3 = arith.constant 0 : index
      %8 = vector.load %arg2[%c0, %c0_3] : memref<8x256xf32, #tpu.memory_space<vmem>>, vector<8x256xf32>
      %c0_4 = arith.constant 0 : index
      %c0_5 = arith.constant 0 : index
      %c0_6 = arith.constant 0 : index
      %9 = vector.load %arg3[%c0_4, %c0_5, %c0_6] : memref<1x8x8xf32, #tpu.memory_space<vmem>>, vector<1x8x8xf32>
      %10 = vector.shape_cast %9 : vector<1x8x8xf32> to vector<8x8xf32>
      %cst = arith.constant dense<0.000000e+00> : vector<8x8xf32>
      %11 = tpu.matmul %8, %8, %cst {dimension_numbers = #tpu.dot_dimension_numbers<[1], [1], [0], [0], [0, 0, 1, 0], [], []>} : vector<8x256xf32>, vector<8x256xf32>, vector<8x8xf32> -> vector<8x8xf32>
      %12 = arith.addf %10, %11 : vector<8x8xf32>
      %c0_7 = arith.constant 0 : index
      %c0_8 = arith.constant 0 : index
      %c0_9 = arith.constant 0 : index
      %13 = vector.load %arg3[%c0_7, %c0_8, %c0_9] : memref<1x8x8xf32, #tpu.memory_space<vmem>>, vector<1x8x8xf32>
      %14 = vector.shape_cast %13 : vector<1x8x8xf32> to vector<8x8xf32>
      %15 = vector.shape_cast %12 : vector<8x8xf32> to vector<1x8x8xf32>
      tpu.vector_store %arg3[%c0_7, %c0_8, %c0_9], %15 {strides = array<i32>} : memref<1x8x8xf32, #tpu.memory_space<vmem>>, vector<1x8x8xf32>,
    } else {
    }
    return
  }
  func.func @transform_0(%arg0: i32, %arg1: i32) -> (i32, i32) {
    %c1_i32 = arith.constant 1 : i32
    %0 = arith.muli %arg0, %c1_i32 : i32
    %1 = arith.addi %0, %arg1 : i32
    %c0_i32 = arith.constant 0 : i32
    %2 = arith.minsi %1, %c0_i32 : i32
    %c0_i32_0 = arith.constant 0 : i32
    %c0_i32_1 = arith.constant 0 : i32
    return %c0_i32_0, %2 : i32, i32
  }
  func.func @transform_1(%arg0: i32, %arg1: i32) -> (i32, i32, i32) {
    %c0_i32 = arith.constant 0 : i32
    %c0_i32_0 = arith.constant 0 : i32
    %c0_i32_1 = arith.constant 0 : i32
    return %arg0, %c0_i32, %c0_i32_0 : i32, i32, i32
  }
}

</mosaic_0001>

<llo_original>
// kernel: tpu_custom_call.1
$region0: #{tpu_custom_call.1}
  #allocation0 [shape = 'u32[]', space=smem, size = 0x4, offset = 0x4, fixed_abs, tag = 'smem constant byte address 0x4 - core index']
  #allocation1 [shape = 'u32[144,128]{1,0:T(1,128)}', space=vmem, size = 0x12000, scoped, tag = 'internal scratch']
  %s0 = inlined_call_operand.hbm [shape: f32[8,256], index: 0, kind: input, shape index: {}]
  %s1 = inlined_call_operand.hbm [shape: f32[1,8,8], index: 1, kind: output, shape index: {}]
  %s2 = sld [smem:[#allocation0]]
  $region26: #{tpu_custom_call.1} parent=0
    _
  %s4 = ssub.s32 1, %s2
  %s5 = scalar_select 0, %s4, %s2
  $region1: #{tpu_custom_call.1} parent=0
    #allocation2 [shape = 'u8[8192]{0}', space=vmem, size = 0x2000, scoped, tag = 'input window, operand 0, single buffered']
    #allocation3 [shape = 's32[1]{0}', space=sflag, size = 0x4, scoped, tag = 'scoped memory for tpu_custom_call.1']
    #allocation4 [shape = 's32[1]{0}', space=sflag, size = 0x4, scoped, tag = 'scoped memory for tpu_custom_call.1']
    #allocation5 [shape = 'u8[4096]{0}', space=vmem, size = 0x1000, scoped, tag = 'output window, operand 0, single buffered']
    %6 = vsyncpa [#allocation3], 0
    %7 = vsyncpa [#allocation4], 0
    // Predicated region
    $region2: #{tpu_custom_call.1} parent=1 // pred_check
      _
    $region3: #{tpu_custom_call.1} parent=1 // pred_check_branch
      %9 = sbr.rel (0) target = $region5
    $region4: #{tpu_custom_call.1} parent=1 // pred_region
      %s10 = sadd.s32 0, 0
      %p11 = scmp.lt.s32.totalorder %s10, 0
      %s12 = scalar_select %p11, %s10, 0
      %s13 = smul.u32 2, %s12
      %s15 = ssub.s32 256, 256
      %16 = vsyncadd [#allocation3], %s15
      %s17 = smul.addr %s13, 128
      %s18 = scalar_lea.hbm %s0, %s17
      %s20 = sshll.u32 [#allocation2], 4
      %s21 = int_to_ptr.vmem [resolvable:$true] %s20
      %23 = dma.hbm_to_vmem [thread:$0]  %s18, 256, %s21, [#allocation3]
    $region5: #{tpu_custom_call.1} parent=1 // pred_fallthru
      _
    // Predicated region
    $region6: #{tpu_custom_call.1} parent=1 // pred_check
      _
    $region7: #{tpu_custom_call.1} parent=1 // pred_check_branch
      %25 = sbr.rel (0) target = $region9
    $region8: #{tpu_custom_call.1} parent=1 // pred_region
      %26 = dma.done [#allocation3], 256
    $region9: #{tpu_custom_call.1} parent=1 // pred_fallthru
      _
    %s27 = sadd.s32 0, 0
    %p28 = scmp.lt.s32.totalorder %s27, 0
    %s29 = scalar_select %p28, %s27, 0
    %s30 = smul.u32 2, %s29
    %s31 = sadd.s32 0, 0
    %p32 = scmp.eq.s32.totalorder 0, 0
    // Predicated region
    $region10: #{tpu_custom_call.1} parent=1 // pred_check
      %p33 = pneg %p32
    $region11: #{tpu_custom_call.1} parent=1 // pred_check_branch
      %35 = sbr.rel (%p33) target = $region13
    $region12: #{tpu_custom_call.1} parent=1 // pred_region
      %vm36 = vcmask 64512
      %37 = vst.msk [vmem:[#allocation5] sm:$0xff] %vm36, 0.0
    $region13: #{tpu_custom_call.1} parent=1 // pred_fallthru
      _
    %p38 = scmp.lt.s32.totalorder %s31, 1
    // Predicated region
    $region14: #{tpu_custom_call.1} parent=1 // pred_check
      %p39 = pneg %p38
    $region15: #{tpu_custom_call.1} parent=1 // pred_check_branch
      %41 = sbr.rel (%p39) target = $region17
    $region16: #{tpu_custom_call.1} parent=1 // pred_region
      %v42 = vld [vmem:[#allocation2] sm:$0xff]
      %v43 = vld [vmem:[#allocation2 + $0x8] sm:$0xff]
      %v44 = vld [vmem:[#allocation5] sm:$0xff]
      %45 = vmatprep.subr.mxu0 0.0
      %46 = vmatpush1.xpose.msra.mxu0 0.0
      %47 = vmatprep.subr.mxu0 0.0
      %48 = vmatpush1.xpose.msra.mxu0 0.0
      %49 = vmatprep.subr.mxu0 0.0
      %50 = vmatpush1.xpose.msra.mxu0 0.0
      %51 = vmatprep.subr.mxu0 0.0
      %52 = vmatpush1.xpose.msra.mxu0 0.0
      %53 = vmatprep.subr.mxu0 0.0
      %54 = vmatpush1.xpose.msra.mxu0 0.0
      %55 = vmatprep.subr.mxu0 0.0
      %56 = vmatpush1.xpose.msra.mxu0 0.0
      %57 = vmatprep.subr.mxu0 0.0
      %58 = vmatpush1.xpose.msra.mxu0 0.0
      %59 = vmatprep.subr.mxu0 0.0
      %60 = vmatpush1.xpose.msra.mxu0 0.0
      %61 = vmatprep.subr.mxu0 0.0
      %62 = vmatpush1.xpose.msra.mxu0 0.0
      %63 = vmatprep.subr.mxu0 0.0
      %64 = vmatpush1.xpose.msra.mxu0 0.0
      %65 = vmatprep.subr.mxu0 0.0
      %66 = vmatpush1.xpose.msra.mxu0 0.0
      %67 = vmatprep.subr.mxu0 0.0
      %68 = vmatpush1.xpose.msra.mxu0 0.0
      %69 = vmatprep.subr.mxu0 0.0
      %70 = vmatpush1.xpose.msra.mxu0 0.0
      %71 = vmatprep.subr.mxu0 0.0
      %72 = vmatpush1.xpose.msra.mxu0 0.0
      %73 = vmatprep.subr.mxu0 0.0
      %74 = vmatpush1.xpose.msra.mxu0 0.0
      %75 = vmatprep.subr.mxu0 %v43
      %76 = vmatpush1.xpose.msra.mxu0 %v42
      %77 = vmatprep.subr.mxu0 0.0
      %78 = vmatpush2.xpose.msra.mxu0 0.0
      %79 = vmatprep.subr.mxu0 0.0
      %80 = vmatpush2.xpose.msra.mxu0 0.0
      %81 = vmatprep.subr.mxu0 0.0
      %82 = vmatpush2.xpose.msra.mxu0 0.0
      %83 = vmatprep.subr.mxu0 0.0
      %84 = vmatpush2.xpose.msra.mxu0 0.0
      %85 = vmatprep.subr.mxu0 0.0
      %86 = vmatpush2.xpose.msra.mxu0 0.0
      %87 = vmatprep.subr.mxu0 0.0
      %88 = vmatpush2.xpose.msra.mxu0 0.0
      %89 = vmatprep.subr.mxu0 0.0
      %90 = vmatpush2.xpose.msra.mxu0 0.0
      %91 = vmatprep.subr.mxu0 0.0
      %92 = vmatpush2.xpose.msra.mxu0 0.0
      %93 = vmatprep.subr.mxu0 0.0
      %94 = vmatpush2.xpose.msra.mxu0 0.0
      %95 = vmatprep.subr.mxu0 0.0
      %96 = vmatpush2.xpose.msra.mxu0 0.0
      %97 = vmatprep.subr.mxu0 0.0
      %98 = vmatpush2.xpose.msra.mxu0 0.0
      %99 = vmatprep.subr.mxu0 0.0
      %100 = vmatpush2.xpose.msra.mxu0 0.0
      %101 = vmatprep.subr.mxu0 0.0
      %102 = vmatpush2.xpose.msra.mxu0 0.0
      %103 = vmatprep.subr.mxu0 0.0
      %104 = vmatpush2.xpose.msra.mxu0 0.0
      %105 = vmatprep.subr.mxu0 0.0
      %106 = vmatpush2.xpose.msra.mxu0 0.0
      %107 = vmatprep.subr.mxu0 0.0
      %108 = vmatpush2.xpose.msra.mxu0 0.0
      %109 = vmatprep.mubr.f32.mxu0 %v43
      %110 = vmatmul.mubr.f32.gmra.mxu0 %v42
      %v111 = vpop.f32.mrf.mxu0
      %v112 = vadd.f32 0.0, %v111
      %v113 = vpop.f32.mrf.mxu0
      %114 = vdwg.mxu0
      %v115 = vadd.f32 %v44, %v112
      %vm116 = vcmask 64512
      %117 = vst.msk [vmem:[#allocation5] sm:$0xff] %vm116, %v115
    $region17: #{tpu_custom_call.1} parent=1 // pred_fallthru
      _
    // Predicated region
    $region18: #{tpu_custom_call.1} parent=1 // pred_check
      _
    $region19: #{tpu_custom_call.1} parent=1 // pred_check_branch
      %119 = sbr.rel (0) target = $region21
    $region20: #{tpu_custom_call.1} parent=1 // pred_region
      %s121 = ssub.s32 128, 128
      %122 = vsyncadd [#allocation4], %s121
      %s124 = sshll.u32 [#allocation5], 4
      %s125 = int_to_ptr.vmem [resolvable:$true] %s124
      %127 = dma.vmem_to_hbm [thread:$0]  %s125, 128, %s1, [#allocation4]
    $region21: #{tpu_custom_call.1} parent=1 // pred_fallthru
      _
    // Predicated region
    $region22: #{tpu_custom_call.1} parent=1 // pred_check
      _
    $region23: #{tpu_custom_call.1} parent=1 // pred_check_branch
      %129 = sbr.rel (0) target = $region25
    $region24: #{tpu_custom_call.1} parent=1 // pred_region
      %130 = dma.done [#allocation4], 128
    $region25: #{tpu_custom_call.1} parent=1 // pred_fallthru
      _
    %131 = vsyncpa [#allocation3], 1
    %132 = vsyncpa [#allocation4], 1

</llo_original>
